<compile_context>
chip_gen: v7x
topology: tpu7x:2x2x1
jax: 0.10.0
libtpu: 0.0.40
codegen_flags: <defaults>
</compile_context>

<pallas_src>
import jax
import jax.numpy as jnp
import numpy as np
from jax.experimental import pallas as pl
from jax.experimental.pallas import tpu as pltpu

PAD = 2        # halo rows per side (largest kernel: k=5 -> padding=2)
HALO_BLK = 8   # sublane-aligned block used to fetch neighbour rows
NTAP = 5       # number of tap shifts (offsets -2 .. +2)
NG = 6         # 3 convs x 2 output channels


def cnn_head_kernel(x_ref, xprev_ref, xnext_ref, w_ref, b_ref, o_ref, xw_ref):
    # x_ref    : (TL, H)       current sequence tile (batch dim squeezed)
    # xprev_ref: (8, H)        8-row block ending just before this tile
    # xnext_ref: (8, H)        8-row block starting just after this tile
    # w_ref    : (5, H, 6)     packed tap weights, columns = [c1 | c3 | c5]
    # b_ref    : (1, 6)        packed biases      [b1 | b3 | b5]
    # o_ref    : (TL, 2)
    # xw_ref   : (TL + 16, H)  VMEM scratch: halo'ed window (replaces host pad)
    tl = o_ref.shape[0]
    t = pl.program_id(1)
    nt = pl.num_programs(1)
    dt = x_ref.dtype

    # Assemble the halo'ed window with aligned full-block stores.  Neighbour
    # blocks are zeroed at the sequence boundaries to emulate Conv1d zero pad.
    xw_ref[0:HALO_BLK, :] = xprev_ref[...] * (t > 0).astype(dt)
    xw_ref[HALO_BLK:HALO_BLK + tl, :] = x_ref[...]
    xw_ref[HALO_BLK + tl:2 * HALO_BLK + tl, :] = (
        xnext_ref[...] * (t < nt - 1).astype(dt))

    xw = xw_ref[...]
    base = HALO_BLK - PAD  # window row for tap shift 0 (offset -2) at out row 0

    # Fused conv: 5 shifted (TL, H) @ (H, 6) matmuls into ONE accumulator,
    # native-dtype operands, f32 MXU accumulation.
    acc = jnp.broadcast_to(b_ref[...].astype(jnp.float32), (tl, NG))
    for s in range(NTAP):  # static unroll over tap shifts
        acc = acc + jnp.dot(xw[base + s:base + s + tl, :], w_ref[s],
                            preferred_element_type=jnp.float32)

    # ReLU each conv's 2-column group, then sum.
    out = (jnp.maximum(acc[:, 0:2], 0.0)
           + jnp.maximum(acc[:, 2:4], 0.0)
           + jnp.maximum(acc[:, 4:6], 0.0))
    o_ref[...] = out.astype(o_ref.dtype)


def pack_cnn_head_params(w1, b1, w3, b3, w5, b5):
    """Pack PyTorch Conv1d params (out=2, in=H, k) into (5, H, 6) + (1, 6).

    Tap-shift-major: shift s corresponds to sequence offset s-2.  Host-side,
    one-time (in a real model this would be precomputed from module params).
    """
    H = w1.shape[1]
    wp = jnp.zeros((NTAP, H, NG), dtype=w1.dtype)
    wp = wp.at[2, :, 0:2].set(w1[:, :, 0].T)            # conv1: offset 0
    for j in range(3):                                  # conv3: offset j-1
        wp = wp.at[j + 1, :, 2:4].set(w3[:, :, j].T)
    for j in range(5):                                  # conv5: offset j-2
        wp = wp.at[j, :, 4:6].set(w5[:, :, j].T)
    bp = jnp.concatenate([b1, b3, b5]).reshape(1, NG)
    return wp, bp


def _default_tile_l(L, H, itemsize):
    """Largest multiple of 8 dividing L whose double-buffered tile <= ~4 MiB
    (safe for v5e's 16 MiB scoped default and v7x's 64 MiB physical VMEM)."""
    budget = 4 * 1024 * 1024
    cap = max(8, budget // (2 * H * itemsize))
    best, cand = 8, 8
    while cand <= min(L, cap):
        if L % cand == 0:
            best = cand
        cand += 8
    return best


def cnn_head_pallas(x, w1, b1, w3, b3, w5, b5, tile_l=None):
    """x: (B, L, H); wK: PyTorch Conv1d weights (2, H, k); bK: (2,) -> (B, L, 2)."""
    B, L, H = x.shape
    if L % 8 != 0:
        # TODO(synk): support sequence lengths that are not multiples of 8
        # (mask a padded final tile in-kernel).
        raise ValueError("sequence length must be a multiple of 8")
    if tile_l is None:
        tile_l = _default_tile_l(L, H, x.dtype.itemsize)
    assert tile_l % 8 == 0 and L % tile_l == 0, (L, tile_l)
    n_tiles = L // tile_l
    tl8 = tile_l // HALO_BLK
    last_blk8 = L // HALO_BLK - 1

    wp, bp = pack_cnn_head_params(w1, b1, w3, b3, w5, b5)

    grid_spec = pltpu.PrefetchScalarGridSpec(
        num_scalar_prefetch=0,
        grid=(B, n_tiles),
        in_specs=[
            # main tile: streamed through VMEM exactly once, auto double-buffered
            pl.BlockSpec((None, tile_l, H), lambda b, t: (b, t, 0)),
            # 8-row block just before the tile (left-halo source)
            pl.BlockSpec((None, HALO_BLK, H),
                         lambda b, t: (b, jnp.maximum(t * tl8 - 1, 0), 0)),
            # 8-row block just after the tile (right-halo source)
            pl.BlockSpec((None, HALO_BLK, H),
                         lambda b, t: (b, jnp.minimum((t + 1) * tl8, last_blk8), 0)),
            pl.BlockSpec((NTAP, H, NG), lambda b, t: (0, 0, 0)),
            pl.BlockSpec((1, NG), lambda b, t: (0, 0)),
        ],
        out_specs=pl.BlockSpec((None, tile_l, 2), lambda b, t: (b, t, 0)),
        scratch_shapes=[pltpu.VMEM((tile_l + 2 * HALO_BLK, H), x.dtype)],
    )
    return pl.pallas_call(
        cnn_head_kernel,
        out_shape=jax.ShapeDtypeStruct((B, L, 2), x.dtype),
        grid_spec=grid_spec,
        compiler_params=pltpu.CompilerParams(
            dimension_semantics=("parallel", "parallel")),
    )(x, x, x, wp, bp)


def ref_cnn_head(x, w1, b1, w3, b3, w5, b5):
    """Pure-JAX reference using lax.conv (PyTorch OIH weight layout)."""
    def conv1d(xn, w, b, pad):
        xt = jnp.transpose(xn, (0, 2, 1))                    # (B, H, L) NCW
        y = jax.lax.conv_general_dilated(
            xt, w, window_strides=(1,), padding=[(pad, pad)],
            dimension_numbers=("NCH", "OIH", "NCH"))
        y = y + b.reshape(1, -1, 1)
        return jnp.transpose(y, (0, 2, 1))                   # (B, L, 2)
    return (jnp.maximum(conv1d(x, w1, b1, 0), 0.0)
            + jnp.maximum(conv1d(x, w3, b3, 1), 0.0)
            + jnp.maximum(conv1d(x, w5, b5, 2), 0.0))


if __name__ == "__main__":
    B, L, H = 2, 32, 32  # batch, seq_len, hidden (input_size=H)
    key = jax.random.PRNGKey(0)
    kx, k1w, k1b, k3w, k3b, k5w, k5b = jax.random.split(key, 7)

    x = jax.random.normal(kx, (B, L, H), dtype=jnp.float32)

    # PyTorch Conv1d weight layout: (out_channels=2, in_channels=H, kernel_size=k)
    w1 = jax.random.normal(k1w, (2, H, 1), dtype=jnp.float32) * 0.1
    b1 = jax.random.normal(k1b, (2,), dtype=jnp.float32) * 0.1
    w3 = jax.random.normal(k3w, (2, H, 3), dtype=jnp.float32) * 0.1
    b3 = jax.random.normal(k3b, (2,), dtype=jnp.float32) * 0.1
    w5 = jax.random.normal(k5w, (2, H, 5), dtype=jnp.float32) * 0.1
    b5 = jax.random.normal(k5b, (2,), dtype=jnp.float32) * 0.1

    # tile_l=8 -> 4 L-tiles per batch element: exercises the cross-tile halo
    # path as well as the boundary (zero-pad) masking.
    out = cnn_head_pallas(x, w1, b1, w3, b3, w5, b5, tile_l=8)
    out = jax.block_until_ready(out)

    ref = ref_cnn_head(x, w1, b1, w3, b3, w5, b5)
    assert out.shape == (B, L, 2), out.shape
    np.testing.assert_allclose(np.asarray(out), np.asarray(ref), rtol=1e-4, atol=1e-4)

    print("KERNEL_OK")
</pallas_src>

<mosaic_0001>
module attributes {stable_mosaic.version = 11 : i64} {
  func.func @cnn_head_kernel(%arg0: i32, %arg1: i32, %arg2: memref<1x8x32xf32, #tpu.memory_space<vmem>>, %arg3: memref<1x8x32xf32, #tpu.memory_space<vmem>>, %arg4: memref<1x8x32xf32, #tpu.memory_space<vmem>>, %arg5: memref<5x32x6xf32, #tpu.memory_space<vmem>>, %arg6: memref<1x6xf32, #tpu.memory_space<vmem>>, %arg7: memref<1x8x2xf32, #tpu.memory_space<vmem>>, %arg8: memref<24x32xf32, #tpu.memory_space<vmem>>) attributes {dimension_semantics = [#tpu.dimension_semantics<parallel>, #tpu.dimension_semantics<parallel>], iteration_bounds = array<i64: 2, 4>, scalar_prefetch = 0 : i64, scratch_operands = 1 : i64, tpu.core_type = #tpu.core_type<tc>, window_params = [{transform_indices = @transform_0, window_bounds = array<i64: 1, 8, 32>}, {transform_indices = @transform_1, window_bounds = array<i64: 1, 8, 32>}, {transform_indices = @transform_2, window_bounds = array<i64: 1, 8, 32>}, {pipeline_mode = #tpu.pipeline_mode<synchronous>, transform_indices = @transform_3, window_bounds = array<i64: 5, 32, 6>}, {pipeline_mode = #tpu.pipeline_mode<synchronous>, transform_indices = @transform_4, window_bounds = array<i64: 1, 6>}, {transform_indices = @transform_5, window_bounds = array<i64: 1, 8, 2>}]} {
    %c0 = arith.constant 0 : index
    %c0_0 = arith.constant 0 : index
    %c0_1 = arith.constant 0 : index
    %0 = vector.load %arg3[%c0, %c0_0, %c0_1] : memref<1x8x32xf32, #tpu.memory_space<vmem>>, vector<1x8x32xf32>
    %1 = vector.shape_cast %0 : vector<1x8x32xf32> to vector<8x32xf32>
    %c0_i32 = arith.constant 0 : i32
    %2 = arith.cmpi sgt, %arg1, %c0_i32 : i32
    %3 = arith.extui %2 : i1 to i32
    %4 = arith.sitofp %3 : i32 to f32
    %5 = vector.broadcast %4 : f32 to vector<8x32xf32>
    %6 = arith.mulf %1, %5 : vector<8x32xf32>
    %c0_2 = arith.constant 0 : index
    %c0_3 = arith.constant 0 : index
    %7 = vector.load %arg8[%c0_2, %c0_3] : memref<24x32xf32, #tpu.memory_space<vmem>>, vector<8x32xf32>
    tpu.vector_store %arg8[%c0_2, %c0_3], %6 {strides = array<i32>} : memref<24x32xf32, #tpu.memory_space<vmem>>, vector<8x32xf32>,
    %c0_4 = arith.constant 0 : index
    %c0_5 = arith.constant 0 : index
    %c0_6 = arith.constant 0 : index
    %8 = vector.load %arg2[%c0_4, %c0_5, %c0_6] : memref<1x8x32xf32, #tpu.memory_space<vmem>>, vector<1x8x32xf32>
    %9 = vector.shape_cast %8 : vector<1x8x32xf32> to vector<8x32xf32>
    %c8 = arith.constant 8 : index
    %c0_7 = arith.constant 0 : index
    %10 = vector.load %arg8[%c8, %c0_7] : memref<24x32xf32, #tpu.memory_space<vmem>>, vector<8x32xf32>
    tpu.vector_store %arg8[%c8, %c0_7], %9 {strides = array<i32>} : memref<24x32xf32, #tpu.memory_space<vmem>>, vector<8x32xf32>,
    %c0_8 = arith.constant 0 : index
    %c0_9 = arith.constant 0 : index
    %c0_10 = arith.constant 0 : index
    %11 = vector.load %arg4[%c0_8, %c0_9, %c0_10] : memref<1x8x32xf32, #tpu.memory_space<vmem>>, vector<1x8x32xf32>
    %12 = vector.shape_cast %11 : vector<1x8x32xf32> to vector<8x32xf32>
    %c3_i32 = arith.constant 3 : i32
    %13 = arith.cmpi slt, %arg1, %c3_i32 : i32
    %14 = arith.extui %13 : i1 to i32
    %15 = arith.sitofp %14 : i32 to f32
    %16 = vector.broadcast %15 : f32 to vector<8x32xf32>
    %17 = arith.mulf %12, %16 : vector<8x32xf32>
    %c16 = arith.constant 16 : index
    %c0_11 = arith.constant 0 : index
    %18 = vector.load %arg8[%c16, %c0_11] : memref<24x32xf32, #tpu.memory_space<vmem>>, vector<8x32xf32>
    tpu.vector_store %arg8[%c16, %c0_11], %17 {strides = array<i32>} : memref<24x32xf32, #tpu.memory_space<vmem>>, vector<8x32xf32>,
    %c0_12 = arith.constant 0 : index
    %c0_13 = arith.constant 0 : index
    %19 = vector.load %arg8[%c0_12, %c0_13] : memref<24x32xf32, #tpu.memory_space<vmem>>, vector<24x32xf32>
    %c0_14 = arith.constant 0 : index
    %c0_15 = arith.constant 0 : index
    %20 = vector.load %arg6[%c0_14, %c0_15] : memref<1x6xf32, #tpu.memory_space<vmem>>, vector<1x6xf32>
    %21 = vector.shape_cast %20 : vector<1x6xf32> to vector<1x6xf32>
    %22 = vector.broadcast %21 : vector<1x6xf32> to vector<8x6xf32>
    %23 = vector.extract_strided_slice %19 {offsets = [6, 0], sizes = [8, 32], strides = [1, 1]} : vector<24x32xf32> to vector<8x32xf32>
    %c0_16 = arith.constant 0 : index
    %c0_17 = arith.constant 0 : index
    %c0_18 = arith.constant 0 : index
    %24 = vector.load %arg5[%c0_16, %c0_17, %c0_18] : memref<5x32x6xf32, #tpu.memory_space<vmem>>, vector<1x32x6xf32>
    %25 = vector.shape_cast %24 : vector<1x32x6xf32> to vector<32x6xf32>
    %cst = arith.constant dense<0.000000e+00> : vector<8x6xf32>
    %26 = tpu.matmul %23, %25, %cst {dimension_numbers = #tpu.dot_dimension_numbers<[1], [0], [0], [1], [0, 0, 1, 1], [], []>} : vector<8x32xf32>, vector<32x6xf32>, vector<8x6xf32> -> vector<8x6xf32>
    %27 = arith.addf %22, %26 : vector<8x6xf32>
    %28 = vector.extract_strided_slice %19 {offsets = [7, 0], sizes = [8, 32], strides = [1, 1]} : vector<24x32xf32> to vector<8x32xf32>
    %c1 = arith.constant 1 : index
    %c0_19 = arith.constant 0 : index
    %c0_20 = arith.constant 0 : index
    %29 = vector.load %arg5[%c1, %c0_19, %c0_20] : memref<5x32x6xf32, #tpu.memory_space<vmem>>, vector<1x32x6xf32>
    %30 = vector.shape_cast %29 : vector<1x32x6xf32> to vector<32x6xf32>
    %cst_21 = arith.constant dense<0.000000e+00> : vector<8x6xf32>
    %31 = tpu.matmul %28, %30, %cst_21 {dimension_numbers = #tpu.dot_dimension_numbers<[1], [0], [0], [1], [0, 0, 1, 1], [], []>} : vector<8x32xf32>, vector<32x6xf32>, vector<8x6xf32> -> vector<8x6xf32>
    %32 = arith.addf %27, %31 : vector<8x6xf32>
    %33 = vector.extract_strided_slice %19 {offsets = [8, 0], sizes = [8, 32], strides = [1, 1]} : vector<24x32xf32> to vector<8x32xf32>
    %c2 = arith.constant 2 : index
    %c0_22 = arith.constant 0 : index
    %c0_23 = arith.constant 0 : index
    %34 = vector.load %arg5[%c2, %c0_22, %c0_23] : memref<5x32x6xf32, #tpu.memory_space<vmem>>, vector<1x32x6xf32>
    %35 = vector.shape_cast %34 : vector<1x32x6xf32> to vector<32x6xf32>
    %cst_24 = arith.constant dense<0.000000e+00> : vector<8x6xf32>
    %36 = tpu.matmul %33, %35, %cst_24 {dimension_numbers = #tpu.dot_dimension_numbers<[1], [0], [0], [1], [0, 0, 1, 1], [], []>} : vector<8x32xf32>, vector<32x6xf32>, vector<8x6xf32> -> vector<8x6xf32>
    %37 = arith.addf %32, %36 : vector<8x6xf32>
    %38 = vector.extract_strided_slice %19 {offsets = [9, 0], sizes = [8, 32], strides = [1, 1]} : vector<24x32xf32> to vector<8x32xf32>
    %c3 = arith.constant 3 : index
    %c0_25 = arith.constant 0 : index
    %c0_26 = arith.constant 0 : index
    %39 = vector.load %arg5[%c3, %c0_25, %c0_26] : memref<5x32x6xf32, #tpu.memory_space<vmem>>, vector<1x32x6xf32>
    %40 = vector.shape_cast %39 : vector<1x32x6xf32> to vector<32x6xf32>
    %cst_27 = arith.constant dense<0.000000e+00> : vector<8x6xf32>
    %41 = tpu.matmul %38, %40, %cst_27 {dimension_numbers = #tpu.dot_dimension_numbers<[1], [0], [0], [1], [0, 0, 1, 1], [], []>} : vector<8x32xf32>, vector<32x6xf32>, vector<8x6xf32> -> vector<8x6xf32>
    %42 = arith.addf %37, %41 : vector<8x6xf32>
    %43 = vector.extract_strided_slice %19 {offsets = [10, 0], sizes = [8, 32], strides = [1, 1]} : vector<24x32xf32> to vector<8x32xf32>
    %c4 = arith.constant 4 : index
    %c0_28 = arith.constant 0 : index
    %c0_29 = arith.constant 0 : index
    %44 = vector.load %arg5[%c4, %c0_28, %c0_29] : memref<5x32x6xf32, #tpu.memory_space<vmem>>, vector<1x32x6xf32>
    %45 = vector.shape_cast %44 : vector<1x32x6xf32> to vector<32x6xf32>
    %cst_30 = arith.constant dense<0.000000e+00> : vector<8x6xf32>
    %46 = tpu.matmul %43, %45, %cst_30 {dimension_numbers = #tpu.dot_dimension_numbers<[1], [0], [0], [1], [0, 0, 1, 1], [], []>} : vector<8x32xf32>, vector<32x6xf32>, vector<8x6xf32> -> vector<8x6xf32>
    %47 = arith.addf %42, %46 : vector<8x6xf32>
    %48 = vector.extract_strided_slice %47 {offsets = [0, 0], sizes = [8, 2], strides = [1, 1]} : vector<8x6xf32> to vector<8x2xf32>
    %cst_31 = arith.constant 0.000000e+00 : f32
    %49 = vector.broadcast %cst_31 : f32 to vector<8x2xf32>
    %50 = arith.maximumf %48, %49 : vector<8x2xf32>
    %51 = vector.extract_strided_slice %47 {offsets = [0, 2], sizes = [8, 2], strides = [1, 1]} : vector<8x6xf32> to vector<8x2xf32>
    %cst_32 = arith.constant 0.000000e+00 : f32
    %52 = vector.broadcast %cst_32 : f32 to vector<8x2xf32>
    %53 = arith.maximumf %51, %52 : vector<8x2xf32>
    %54 = arith.addf %50, %53 : vector<8x2xf32>
    %55 = vector.extract_strided_slice %47 {offsets = [0, 4], sizes = [8, 2], strides = [1, 1]} : vector<8x6xf32> to vector<8x2xf32>
    %cst_33 = arith.constant 0.000000e+00 : f32
    %56 = vector.broadcast %cst_33 : f32 to vector<8x2xf32>
    %57 = arith.maximumf %55, %56 : vector<8x2xf32>
    %58 = arith.addf %54, %57 : vector<8x2xf32>
    %c0_34 = arith.constant 0 : index
    %c0_35 = arith.constant 0 : index
    %c0_36 = arith.constant 0 : index
    %59 = vector.load %arg7[%c0_34, %c0_35, %c0_36] : memref<1x8x2xf32, #tpu.memory_space<vmem>>, vector<1x8x2xf32>
    %60 = vector.shape_cast %59 : vector<1x8x2xf32> to vector<8x2xf32>
    %61 = vector.shape_cast %58 : vector<8x2xf32> to vector<1x8x2xf32>
    tpu.vector_store %arg7[%c0_34, %c0_35, %c0_36], %61 {strides = array<i32>} : memref<1x8x2xf32, #tpu.memory_space<vmem>>, vector<1x8x2xf32>,
    return
  }
  func.func @transform_0(%arg0: i32, %arg1: i32) -> (i32, i32, i32) {
    %c0_i32 = arith.constant 0 : i32
    %c0_i32_0 = arith.constant 0 : i32
    return %arg0, %arg1, %c0_i32 : i32, i32, i32
  }
  func.func @transform_1(%arg0: i32, %arg1: i32) -> (i32, i32, i32) {
    %c1_i32 = arith.constant 1 : i32
    %0 = arith.muli %arg1, %c1_i32 : i32
    %c1_i32_0 = arith.constant 1 : i32
    %1 = arith.subi %0, %c1_i32_0 : i32
    %c0_i32 = arith.constant 0 : i32
    %2 = arith.maxsi %1, %c0_i32 : i32
    %c0_i32_1 = arith.constant 0 : i32
    %c0_i32_2 = arith.constant 0 : i32
    return %arg0, %2, %c0_i32_1 : i32, i32, i32
  }
  func.func @transform_2(%arg0: i32, %arg1: i32) -> (i32, i32, i32) {
    %c1_i32 = arith.constant 1 : i32
    %0 = arith.addi %arg1, %c1_i32 : i32
    %c1_i32_0 = arith.constant 1 : i32
    %1 = arith.muli %0, %c1_i32_0 : i32
    %c3_i32 = arith.constant 3 : i32
    %2 = arith.minsi %1, %c3_i32 : i32
    %c0_i32 = arith.constant 0 : i32
    %c0_i32_1 = arith.constant 0 : i32
    return %arg0, %2, %c0_i32 : i32, i32, i32
  }
  func.func @transform_3(%arg0: i32, %arg1: i32) -> (i32, i32, i32) {
    %c0_i32 = arith.constant 0 : i32
    %c0_i32_0 = arith.constant 0 : i32
    %c0_i32_1 = arith.constant 0 : i32
    %c0_i32_2 = arith.constant 0 : i32
    return %c0_i32, %c0_i32_0, %c0_i32_1 : i32, i32, i32
  }
  func.func @transform_4(%arg0: i32, %arg1: i32) -> (i32, i32) {
    %c0_i32 = arith.constant 0 : i32
    %c0_i32_0 = arith.constant 0 : i32
    %c0_i32_1 = arith.constant 0 : i32
    return %c0_i32, %c0_i32_0 : i32, i32
  }
  func.func @transform_5(%arg0: i32, %arg1: i32) -> (i32, i32, i32) {
    %c0_i32 = arith.constant 0 : i32
    %c0_i32_0 = arith.constant 0 : i32
    return %arg0, %arg1, %c0_i32 : i32, i32, i32
  }
}

</mosaic_0001>

<llo_original>
// kernel: tpu_custom_call.1
$region0: #{tpu_custom_call.1}
  #allocation0 [shape = 'u32[]', space=smem, size = 0x4, offset = 0x4, fixed_abs, tag = 'smem constant byte address 0x4 - core index']
  #allocation1 [shape = 'u32[144,128]{1,0:T(1,128)}', space=vmem, size = 0x12000, scoped, tag = 'internal scratch']
  #allocation2 [shape = 'f32[24,32]{1,0:T(8,128)}', space=vmem, size = 0x3000, scoped, tag = 'scratch operand']
  %s0 = inlined_call_operand.vmem [shape: f32[2,32,32], index: 0, kind: input, shape index: {}]
  %s1 = inlined_call_operand.vmem [shape: f32[2,32,32], index: 1, kind: input, shape index: {}]
  %s2 = inlined_call_operand.vmem [shape: f32[2,32,32], index: 2, kind: input, shape index: {}]
  %s3 = inlined_call_operand.vmem [shape: f32[5,32,6], index: 3, kind: input, shape index: {}]
  %s4 = inlined_call_operand.vmem [shape: f32[1,6], index: 4, kind: input, shape index: {}]
  %s5 = inlined_call_operand.vmem [shape: f32[2,32,2], index: 5, kind: output, shape index: {}]
  %s6 = sld [smem:[#allocation0]]
  $region53: #{tpu_custom_call.1} parent=0
    _
  %s8 = ssub.s32 1, %s6
  %s9 = scalar_select 0, %s8, %s6
  loop: start=0, step=1, limit=10
  $region2: #{tpu_custom_call.1} parent=0 // loop_pre_header
    _
  $region3: #{tpu_custom_call.1} parent=0 // loop_header
    %s11 = sphi 0, %s15
    %p12 = scmp.ge.s32.totalorder %s11, 10
    %s18 = sphi 0, %s30
    %s19 = sphi 0, %s26
    %s20 = sphi 0, %s18
    %s21 = sphi 0, %s19
    %s22 = sphi 0, %s20
    %s23 = sphi 0, %s21
    %s35 = sphi 0, %s37
    %s38 = sphi 0, %s35
    %s39 = sphi 0, %s38
    %s55 = sphi 0, %s39
    %s69 = sphi 0, %s71
    %s72 = sphi 0, %s69
    %s73 = sphi 0, %s72
    %s89 = sphi 0, %s73
    %s103 = sphi 0, %s105
    %s106 = sphi 0, %s103
    %s107 = sphi 0, %s106
    %s123 = sphi 0, %s107
    %s127 = sphi 0, %s127
    %s129 = sphi 0, %s127
    %s130 = sphi 0, %s129
    %s144 = sphi 0, %s130
    %s148 = sphi 0, %s148
    %s150 = sphi 0, %s148
    %s151 = sphi 0, %s150
    %s165 = sphi 0, %s151
    %s173 = sphi 0, %s175
    %s176 = sphi 0, %s173
    %s177 = sphi 0, %s176
    %s193 = sphi 0, %s177
  $region4: #{tpu_custom_call.1} parent=0 // loop_header_branch
    %14 = sbr.rel (%p12) target = $region8
  $region5: #{tpu_custom_call.1} parent=0 // loop_body
    %s16 = ssub.s32 %s11, 1
    %s17 = ssub.s32 %s11, 2
    %s24 = sadd.s32 1, %s19
    %p25 = scmp.ge.s32.totalorder %s24, 4
    %s26 = scalar_select %p25, 0, %s24
    %s27 = sadd.s32 1, %s18
    %s28 = scalar_select %p25, %s27, %s18
    %p29 = scmp.ge.s32.totalorder %s28, 2
    %s30 = scalar_select %p29, 0, %s28
    %s31 = ssub.s32 %s18, %s30
    %s32 = ssub.s32 %s19, %s26
    %s33 = sor.u32 %s31, %s32
    %p34 = scmp.eq.s32.totalorder %s33, 0
    %s36 = sadd.s32 %s35, 1
    %s37 = scalar_select %p34, %s35, %s36
    %p40 = pneg %p34
    %p41 = scmp.eq.s32.totalorder %s11, 7
    %p42 = por %p40, %p41
    %p43 = scmp.ne.s32.totalorder %s35, %s38
    %p44 = scmp.eq.s32.totalorder %s11, 0
    %p45 = por %p43, %p44
    %p46 = scmp.ne.s32.totalorder %s35, %s38
    %p47 = scmp.eq.s32.totalorder %s16, 7
    %p48 = por %p46, %p47
    %p49 = scmp.ne.s32.totalorder %s38, %s39
    %p50 = scmp.eq.s32.totalorder %s16, 0
    %p51 = por %p49, %p50
    %p52 = scmp.ne.s32.totalorder %s38, %s39
    %p53 = scmp.eq.s32.totalorder %s17, 7
    %p54 = por %p52, %p53
    %p56 = scmp.ne.s32.totalorder %s39, %s55
    %p57 = scmp.eq.s32.totalorder %s17, 0
    %p58 = por %p56, %p57
    %s59 = ssub.s32 %s19, 1
    %p60 = scmp.gt.s32.totalorder %s59, 0
    %s61 = scalar_select %p60, %s59, 0
    %s62 = ssub.s32 %s26, 1
    %p63 = scmp.gt.s32.totalorder %s62, 0
    %s64 = scalar_select %p63, %s62, 0
    %s65 = ssub.s32 %s18, %s30
    %s66 = ssub.s32 %s61, %s64
    %s67 = sor.u32 %s65, %s66
    %p68 = scmp.eq.s32.totalorder %s67, 0
    %s70 = sadd.s32 %s69, 1
    %s71 = scalar_select %p68, %s69, %s70
    %p74 = pneg %p68
    %p75 = scmp.eq.s32.totalorder %s11, 7
    %p76 = por %p74, %p75
    %p77 = scmp.ne.s32.totalorder %s69, %s72
    %p78 = scmp.eq.s32.totalorder %s11, 0
    %p79 = por %p77, %p78
    %p80 = scmp.ne.s32.totalorder %s69, %s72
    %p81 = scmp.eq.s32.totalorder %s16, 7
    %p82 = por %p80, %p81
    %p83 = scmp.ne.s32.totalorder %s72, %s73
    %p84 = scmp.eq.s32.totalorder %s16, 0
    %p85 = por %p83, %p84
    %p86 = scmp.ne.s32.totalorder %s72, %s73
    %p87 = scmp.eq.s32.totalorder %s17, 7
    %p88 = por %p86, %p87
    %p90 = scmp.ne.s32.totalorder %s73, %s89
    %p91 = scmp.eq.s32.totalorder %s17, 0
    %p92 = por %p90, %p91
    %s93 = sadd.s32 %s19, 1
    %p94 = scmp.lt.s32.totalorder %s93, 3
    %s95 = scalar_select %p94, %s93, 3
    %s96 = sadd.s32 %s26, 1
    %p97 = scmp.lt.s32.totalorder %s96, 3
    %s98 = scalar_select %p97, %s96, 3
    %s99 = ssub.s32 %s18, %s30
    %s100 = ssub.s32 %s95, %s98
    %s101 = sor.u32 %s99, %s100
    %p102 = scmp.eq.s32.totalorder %s101, 0
    %s104 = sadd.s32 %s103, 1
    %s105 = scalar_select %p102, %s103, %s104
    %p108 = pneg %p102
    %p109 = scmp.eq.s32.totalorder %s11, 7
    %p110 = por %p108, %p109
    %p111 = scmp.ne.s32.totalorder %s103, %s106
    %p112 = scmp.eq.s32.totalorder %s11, 0
    %p113 = por %p111, %p112
    %p114 = scmp.ne.s32.totalorder %s103, %s106
    %p115 = scmp.eq.s32.totalorder %s16, 7
    %p116 = por %p114, %p115
    %p117 = scmp.ne.s32.totalorder %s106, %s107
    %p118 = scmp.eq.s32.totalorder %s16, 0
    %p119 = por %p117, %p118
    %p120 = scmp.ne.s32.totalorder %s106, %s107
    %p121 = scmp.eq.s32.totalorder %s17, 7
    %p122 = por %p120, %p121
    %p124 = scmp.ne.s32.totalorder %s107, %s123
    %p125 = scmp.eq.s32.totalorder %s17, 0
    %p126 = por %p124, %p125
    %s128 = sadd.s32 %s127, 1
    %p131 = scmp.eq.s32.totalorder %s11, 7
    %p132 = scmp.ne.s32.totalorder %s127, %s129
    %p133 = scmp.eq.s32.totalorder %s11, 0
    %p134 = por %p132, %p133
    %p135 = scmp.ne.s32.totalorder %s127, %s129
    %p136 = scmp.eq.s32.totalorder %s16, 7
    %p137 = por %p135, %p136
    %p138 = scmp.ne.s32.totalorder %s129, %s130
    %p139 = scmp.eq.s32.totalorder %s16, 0
    %p140 = por %p138, %p139
    %p141 = scmp.ne.s32.totalorder %s129, %s130
    %p142 = scmp.eq.s32.totalorder %s17, 7
    %p143 = por %p141, %p142
    %p145 = scmp.ne.s32.totalorder %s130, %s144
    %p146 = scmp.eq.s32.totalorder %s17, 0
    %p147 = por %p145, %p146
    %s149 = sadd.s32 %s148, 1
    %p152 = scmp.eq.s32.totalorder %s11, 7
    %p153 = scmp.ne.s32.totalorder %s148, %s150
    %p154 = scmp.eq.s32.totalorder %s11, 0
    %p155 = por %p153, %p154
    %p156 = scmp.ne.s32.totalorder %s148, %s150
    %p157 = scmp.eq.s32.totalorder %s16, 7
    %p158 = por %p156, %p157
    %p159 = scmp.ne.s32.totalorder %s150, %s151
    %p160 = scmp.eq.s32.totalorder %s16, 0
    %p161 = por %p159, %p160
    %p162 = scmp.ne.s32.totalorder %s150, %s151
    %p163 = scmp.eq.s32.totalorder %s17, 7
    %p164 = por %p162, %p163
    %p166 = scmp.ne.s32.totalorder %s151, %s165
    %p167 = scmp.eq.s32.totalorder %s17, 0
    %p168 = por %p166, %p167
    %s169 = ssub.s32 %s18, %s30
    %s170 = ssub.s32 %s19, %s26
    %s171 = sor.u32 %s169, %s170
    %p172 = scmp.eq.s32.totalorder %s171, 0
    %s174 = sadd.s32 %s173, 1
    %s175 = scalar_select %p172, %s173, %s174
    %p178 = pneg %p172
    %p179 = scmp.eq.s32.totalorder %s11, 7
    %p180 = por %p178, %p179
    %p181 = scmp.ne.s32.totalorder %s173, %s176
    %p182 = scmp.eq.s32.totalorder %s11, 0
    %p183 = por %p181, %p182
    %p184 = scmp.ne.s32.totalorder %s173, %s176
    %p185 = scmp.eq.s32.totalorder %s16, 7
    %p186 = por %p184, %p185
    %p187 = scmp.ne.s32.totalorder %s176, %s177
    %p188 = scmp.eq.s32.totalorder %s16, 0
    %p189 = por %p187, %p188
    %p190 = scmp.ne.s32.totalorder %s176, %s177
    %p191 = scmp.eq.s32.totalorder %s17, 7
    %p192 = por %p190, %p191
    %p194 = scmp.ne.s32.totalorder %s177, %s193
    %p195 = scmp.eq.s32.totalorder %s17, 0
    %p196 = por %p194, %p195
    %p197 = scmp.le.s32.totalorder 1, %s11
    %p198 = scmp.lt.s32.totalorder %s11, 9
    %p199 = pnand %p197, %p198
    %p200 = pneg %p199
    // Predicated region
    $region9: #{tpu_custom_call.1} parent=5 // pred_check
      _
    $region10: #{tpu_custom_call.1} parent=5 // pred_check_branch
      %202 = sbr.rel (%p199) target = $region12
    $region11: #{tpu_custom_call.1} parent=5 // pred_region
      %s203 = ssub.s32 %s11, 1
      // Predicated region
      $region13: #{tpu_custom_call.1} parent=11 // pred_check
        %p204 = pneg %p140
      $region14: #{tpu_custom_call.1} parent=11 // pred_check_branch
        %206 = sbr.rel (%p204) target = $region16
      $region15: #{tpu_custom_call.1} parent=11 // pred_region
        _
      $region16: #{tpu_custom_call.1} parent=11 // pred_fallthru
        _
      // Predicated region
      $region17: #{tpu_custom_call.1} parent=11 // pred_check
        %p207 = pneg %p161
      $region18: #{tpu_custom_call.1} parent=11 // pred_check_branch
        %209 = sbr.rel (%p207) target = $region20
      $region19: #{tpu_custom_call.1} parent=11 // pred_region
        _
      $region20: #{tpu_custom_call.1} parent=11 // pred_fallthru
        _
    $region12: #{tpu_custom_call.1} parent=5 // pred_fallthru
      _
    %p210 = scmp.lt.s32.totalorder %s11, 8
    // Predicated region
    $region21: #{tpu_custom_call.1} parent=5 // pred_check
      %p211 = pneg %p210
    $region22: #{tpu_custom_call.1} parent=5 // pred_check_branch
      %213 = sbr.rel (%p211) target = $region24
    $region23: #{tpu_custom_call.1} parent=5 // pred_region
      // Predicated region
      $region25: #{tpu_custom_call.1} parent=23 // pred_check
        %p214 = pneg %p45
      $region26: #{tpu_custom_call.1} parent=23 // pred_check_branch
        %216 = sbr.rel (%p214) target = $region28
      $region27: #{tpu_custom_call.1} parent=23 // pred_region
        %p217 = scmp.lt.s32.totalorder %s18, 1
        %s218 = scalar_select %p217, %s18, 1
        %p219 = scmp.lt.s32.totalorder %s19, 3
        %s220 = scalar_select %p219, %s19, 3
        %s221 = smul.addr %s218, 4
        %s222 = sadd.s32 %s220, %s221
        %s223 = smul.addr %s222, 8
        %s224 = scalar_lea.vmem %s0, %s223
      $region28: #{tpu_custom_call.1} parent=23 // pred_fallthru
        _
      // Predicated region
      $region29: #{tpu_custom_call.1} parent=23 // pred_check
        %p225 = pneg %p79
      $region30: #{tpu_custom_call.1} parent=23 // pred_check_branch
        %227 = sbr.rel (%p225) target = $region32
      $region31: #{tpu_custom_call.1} parent=23 // pred_region
        %s228 = ssub.s32 %s19, 1
        %p229 = scmp.gt.s32.totalorder %s228, 0
        %s230 = scalar_select %p229, %s228, 0
        %p231 = scmp.lt.s32.totalorder %s18, 1
        %s232 = scalar_select %p231, %s18, 1
        %p233 = scmp.lt.s32.totalorder %s230, 3
        %s234 = scalar_select %p233, %s230, 3
        %s235 = smul.addr %s232, 4
        %s236 = sadd.s32 %s234, %s235
        %s237 = smul.addr %s236, 8
        %s238 = scalar_lea.vmem %s1, %s237
        %s239 = ssub.s32 %s19, 1
        %p240 = scmp.gt.s32.totalorder %s239, 0
        %s241 = scalar_select %p240, %s239, 0
      $region32: #{tpu_custom_call.1} parent=23 // pred_fallthru
        _
      // Predicated region
      $region33: #{tpu_custom_call.1} parent=23 // pred_check
        %p242 = pneg %p113
      $region34: #{tpu_custom_call.1} parent=23 // pred_check_branch
        %244 = sbr.rel (%p242) target = $region36
      $region35: #{tpu_custom_call.1} parent=23 // pred_region
        %s245 = sadd.s32 %s19, 1
        %p246 = scmp.lt.s32.totalorder %s245, 3
        %s247 = scalar_select %p246, %s245, 3
        %p248 = scmp.lt.s32.totalorder %s18, 1
        %s249 = scalar_select %p248, %s18, 1
        %p250 = scmp.lt.s32.totalorder %s247, 3
        %s251 = scalar_select %p250, %s247, 3
        %s252 = smul.addr %s249, 4
        %s253 = sadd.s32 %s251, %s252
        %s254 = smul.addr %s253, 8
        %s255 = scalar_lea.vmem %s2, %s254
        %s256 = sadd.s32 %s19, 1
        %p257 = scmp.lt.s32.totalorder %s256, 3
        %s258 = scalar_select %p257, %s256, 3
      $region36: #{tpu_custom_call.1} parent=23 // pred_fallthru
        _
    $region24: #{tpu_custom_call.1} parent=5 // pred_fallthru
      _
    %p259 = scmp.le.s32.totalorder 1, %s11
    %p260 = scmp.lt.s32.totalorder %s11, 9
    %p261 = pnand %p259, %p260
    %p262 = pneg %p261
    // Predicated region
    $region37: #{tpu_custom_call.1} parent=5 // pred_check
      _
    $region38: #{tpu_custom_call.1} parent=5 // pred_check_branch
      %264 = sbr.rel (%p261) target = $region40
    $region39: #{tpu_custom_call.1} parent=5 // pred_region
      %s265 = ssub.s32 %s11, 1
      %p266 = scmp.lt.s32.totalorder %s20, 1
      %s267 = scalar_select %p266, %s20, 1
      %p268 = scmp.lt.s32.totalorder %s21, 3
      %s269 = scalar_select %p268, %s21, 3
      %s270 = smul.addr %s267, 4
      %s271 = sadd.s32 %s269, %s270
      %s272 = smul.addr %s271, 8
      %s273 = scalar_lea.vmem %s0, %s272
      %p274 = pneg %p51
      %p275 = pneg %p48
      %s276 = ssub.s32 %s21, 1
      %p277 = scmp.gt.s32.totalorder %s276, 0
      %s278 = scalar_select %p277, %s276, 0
      %p279 = scmp.lt.s32.totalorder %s20, 1
      %s280 = scalar_select %p279, %s20, 1
      %p281 = scmp.lt.s32.totalorder %s278, 3
      %s282 = scalar_select %p281, %s278, 3
      %s283 = smul.addr %s280, 4
      %s284 = sadd.s32 %s282, %s283
      %s285 = smul.addr %s284, 8
      %s286 = scalar_lea.vmem %s1, %s285
      %p287 = pneg %p85
      %p288 = pneg %p82
      %s289 = sadd.s32 %s21, 1
      %p290 = scmp.lt.s32.totalorder %s289, 3
      %s291 = scalar_select %p290, %s289, 3
      %p292 = scmp.lt.s32.totalorder %s20, 1
      %s293 = scalar_select %p292, %s20, 1
      %p294 = scmp.lt.s32.totalorder %s291, 3
      %s295 = scalar_select %p294, %s291, 3
      %s296 = smul.addr %s293, 4
      %s297 = sadd.s32 %s295, %s296
      %s298 = smul.addr %s297, 8
      %s299 = scalar_lea.vmem %s2, %s298
      %p300 = pneg %p119
      %p301 = pneg %p116
      %p302 = pneg %p140
      %p303 = pneg %p137
      %p304 = pneg %p161
      %p305 = pneg %p158
      %p306 = pneg %p189
      %p307 = pneg %p186
      %p308 = scmp.lt.s32.totalorder %s20, 1
      %s309 = scalar_select %p308, %s20, 1
      %p310 = scmp.lt.s32.totalorder %s21, 3
      %s311 = scalar_select %p310, %s21, 3
      %s312 = smul.addr %s309, 4
      %s313 = sadd.s32 %s311, %s312
      %s314 = smul.addr %s313, 8
      %s315 = scalar_lea.vmem %s5, %s314
      %p316 = scmp.lt.s32.totalorder %s20, 1
      %s317 = scalar_select %p316, %s20, 1
      %p318 = scmp.lt.s32.totalorder %s21, 3
      %s319 = scalar_select %p318, %s21, 3
      %s320 = smul.addr %s317, 4
      %s321 = sadd.s32 %s319, %s320
      %s322 = smul.addr %s321, 8
      %s323 = scalar_lea.vmem %s0, %s322
      %s324 = ssub.s32 %s21, 1
      %p325 = scmp.gt.s32.totalorder %s324, 0
      %s326 = scalar_select %p325, %s324, 0
      %p327 = scmp.lt.s32.totalorder %s20, 1
      %s328 = scalar_select %p327, %s20, 1
      %p329 = scmp.lt.s32.totalorder %s326, 3
      %s330 = scalar_select %p329, %s326, 3
      %s331 = smul.addr %s328, 4
      %s332 = sadd.s32 %s330, %s331
      %s333 = smul.addr %s332, 8
      %s334 = scalar_lea.vmem %s1, %s333
      %s335 = ssub.s32 %s21, 1
      %p336 = scmp.gt.s32.totalorder %s335, 0
      %s337 = scalar_select %p336, %s335, 0
      %s338 = sadd.s32 %s21, 1
      %p339 = scmp.lt.s32.totalorder %s338, 3
      %s340 = scalar_select %p339, %s338, 3
      %p341 = scmp.lt.s32.totalorder %s20, 1
      %s342 = scalar_select %p341, %s20, 1
      %p343 = scmp.lt.s32.totalorder %s340, 3
      %s344 = scalar_select %p343, %s340, 3
      %s345 = smul.addr %s342, 4
      %s346 = sadd.s32 %s344, %s345
      %s347 = smul.addr %s346, 8
      %s348 = scalar_lea.vmem %s2, %s347
      %s349 = sadd.s32 %s21, 1
      %p350 = scmp.lt.s32.totalorder %s349, 3
      %s351 = scalar_select %p350, %s349, 3
      %p352 = scmp.lt.s32.totalorder %s20, 1
      %s353 = scalar_select %p352, %s20, 1
      %p354 = scmp.lt.s32.totalorder %s21, 3
      %s355 = scalar_select %p354, %s21, 3
      %s356 = smul.addr %s353, 4
      %s357 = sadd.s32 %s355, %s356
      %s358 = smul.addr %s357, 8
      %s359 = scalar_lea.vmem %s5, %s358
      %v360 = vld [vmem:[%s334] sm:$0xff]
      %p361 = scmp.gt.s32.totalorder %s21, 0
      %s362 = scalar_select %p361, 1, 0
      %s363 = scvt.s32.f32 %s362
      %v364 = vstv %s363
      %v365 = vmul.f32 %v360, %v364
      %vm366 = vcmask 261120
      %367 = vst.msk [vmem:[#allocation2] sm:$0xff] %vm366, %v365
      %v368 = vld [vmem:[%s323] sm:$0xff]
      %369 = vst.msk [vmem:[#allocation2 + $0x8] sm:$0xff] %vm366, %v368
      %v370 = vld [vmem:[%s348] sm:$0xff]
      %p371 = scmp.lt.s32.totalorder %s21, 3
      %s372 = scalar_select %p371, 1, 0
      %s373 = scvt.s32.f32 %s372
      %v374 = vstv %s373
      %v375 = vmul.f32 %v370, %v374
      %376 = vst.msk [vmem:[#allocation2 + $0x10] sm:$0xff] %vm366, %v375
      %v377 = vld [vmem:[#allocation2] sm:$0xff]
      %v378 = vld [vmem:[#allocation2 + $0x8] sm:$0xff]
      %v379 = vld [vmem:[#allocation2 + $0x10] sm:$0xff]
      %v380 = vld [vmem:[%s4] sm:$0x1]
      %v382 = vlaneseq
      %v383 = vshrl.u32 %v382, 7
      %v384 = vsub.s32 0, %v383
      %v385 = vrot.slane %v380, %v384
      %v387 = vld [vmem:[%s3] sm:$0xff]
      %v388 = vld [vmem:[%s3 + $0x8] sm:$0xff]
      %v389 = vld [vmem:[%s3 + $0x10] sm:$0xff]
      %v390 = vld [vmem:[%s3 + $0x18] sm:$0xff]
      %vm393 = vcmask 1041408
      %v394 = vrot.slane %v377, 6
      %v395 = vrot.slane %v378, 6
      %v396 = vsel %vm393, %v394, %v395
      %v397 = vsel %vm366, %v396, 0
      %399 = vmatprep.subr.mxu0 0.0
      %400 = vmatpush1.msra.mxu0 %v387
      %401 = vmatprep.subr.mxu0 0.0
      %402 = vmatpush1.msra.mxu0 %v388
      %403 = vmatprep.subr.mxu0 0.0
      %404 = vmatpush1.msra.mxu0 %v389
      %405 = vmatprep.subr.mxu0 0.0
      %406 = vmatpush1.msra.mxu0 %v390
      %407 = vmatprep.subr.mxu0 0.0
      %408 = vmatpush1.msra.mxu0 0.0
      %409 = vmatprep.subr.mxu0 0.0
      %410 = vmatpush1.msra.mxu0 0.0
      %411 = vmatprep.subr.mxu0 0.0
      %412 = vmatpush1.msra.mxu0 0.0
      %413 = vmatprep.subr.mxu0 0.0
      %414 = vmatpush1.msra.mxu0 0.0
      %415 = vmatprep.subr.mxu0 0.0
      %416 = vmatpush1.msra.mxu0 0.0
      %417 = vmatprep.subr.mxu0 0.0
      %418 = vmatpush1.msra.mxu0 0.0
      %419 = vmatprep.subr.mxu0 0.0
      %420 = vmatpush1.msra.mxu0 0.0
      %421 = vmatprep.subr.mxu0 0.0
      %422 = vmatpush1.msra.mxu0 0.0
      %423 = vmatprep.subr.mxu0 0.0
      %424 = vmatpush1.msra.mxu0 0.0
      %425 = vmatprep.subr.mxu0 0.0
      %426 = vmatpush1.msra.mxu0 0.0
      %427 = vmatprep.subr.mxu0 0.0
      %428 = vmatpush1.msra.mxu0 0.0
      %429 = vmatprep.subr.mxu0 0.0
      %430 = vmatpush1.msra.mxu0 0.0
      %431 = vmatprep.subr.mxu0 0.0
      %432 = vmatpush1.msra.mxu0 0.0
      %433 = vmatprep.subr.mxu0 0.0
      %434 = vmatpush1.msra.mxu0 0.0
      %435 = vmatprep.subr.mxu0 0.0
      %436 = vmatpush1.msra.mxu0 0.0
      %437 = vmatprep.subr.mxu0 0.0
      %438 = vmatpush1.msra.mxu0 0.0
      %439 = vmatprep.subr.mxu0 0.0
      %440 = vmatpush1.msra.mxu0 0.0
      %441 = vmatprep.subr.mxu0 0.0
      %442 = vmatpush1.msra.mxu0 0.0
      %443 = vmatprep.subr.mxu0 0.0
      %444 = vmatpush1.msra.mxu0 0.0
      %445 = vmatprep.subr.mxu0 0.0
      %446 = vmatpush1.msra.mxu0 0.0
      %447 = vmatprep.subr.mxu0 0.0
      %448 = vmatpush1.msra.mxu0 0.0
      %449 = vmatprep.subr.mxu0 0.0
      %450 = vmatpush1.msra.mxu0 0.0
      %451 = vmatprep.subr.mxu0 0.0
      %452 = vmatpush1.msra.mxu0 0.0
      %453 = vmatprep.subr.mxu0 0.0
      %454 = vmatpush1.msra.mxu0 0.0
      %455 = vmatprep.subr.mxu0 0.0
      %456 = vmatpush1.msra.mxu0 0.0
      %457 = vmatprep.subr.mxu0 0.0
      %458 = vmatpush1.msra.mxu0 0.0
      %459 = vmatprep.subr.mxu0 0.0
      %460 = vmatpush1.msra.mxu0 0.0
      %461 = vmatprep.subr.mxu0 0.0
      %462 = vmatpush1.msra.mxu0 0.0
      %463 = vmatprep.mubr.f32.mxu0 0.0
      %464 = vmatmul.mubr.f32.gmra.mrb[0].mxu0 %v397
      %v465 = vpop.f32.mrb[0].mxu0
      %v466 = vadd.f32 0.0, %v465
      %v467 = vpop.f32.mrb[0].mxu0
      %468 = vdwg.mxu0
      %v469 = vadd.f32 %v385, %v466
      %s470 = scalar_lea.vmem %s3, 32
      %v471 = vld [vmem:[%s470] sm:$0xff]
      %v472 = vld [vmem:[%s470 + $0x8] sm:$0xff]
      %v473 = vld [vmem:[%s470 + $0x10] sm:$0xff]
      %v474 = vld [vmem:[%s470 + $0x18] sm:$0xff]
      %vm475 = vcmask 1040384
      %v476 = vrot.slane %v377, 7
      %v477 = vrot.slane %v378, 7
      %v478 = vsel %vm475, %v476, %v477
      %v479 = vsel %vm366, %v478, 0
      %481 = vmatprep.subr.mxu0 0.0
      %482 = vmatpush1.msra.mxu0 %v471
      %483 = vmatprep.subr.mxu0 0.0
      %484 = vmatpush1.msra.mxu0 %v472
      %485 = vmatprep.subr.mxu0 0.0
      %486 = vmatpush1.msra.mxu0 %v473
      %487 = vmatprep.subr.mxu0 0.0
      %488 = vmatpush1.msra.mxu0 %v474
      %489 = vmatprep.subr.mxu0 0.0
      %490 = vmatpush1.msra.mxu0 0.0
      %491 = vmatprep.subr.mxu0 0.0
      %492 = vmatpush1.msra.mxu0 0.0
      %493 = vmatprep.subr.mxu0 0.0
      %494 = vmatpush1.msra.mxu0 0.0
      %495 = vmatprep.subr.mxu0 0.0
      %496 = vmatpush1.msra.mxu0 0.0
      %497 = vmatprep.subr.mxu0 0.0
      %498 = vmatpush1.msra.mxu0 0.0
      %499 = vmatprep.subr.mxu0 0.0
      %500 = vmatpush1.msra.mxu0 0.0
      %501 = vmatprep.subr.mxu0 0.0
      %502 = vmatpush1.msra.mxu0 0.0
      %503 = vmatprep.subr.mxu0 0.0
      %504 = vmatpush1.msra.mxu0 0.0
      %505 = vmatprep.subr.mxu0 0.0
      %506 = vmatpush1.msra.mxu0 0.0
      %507 = vmatprep.subr.mxu0 0.0
      %508 = vmatpush1.msra.mxu0 0.0
      %509 = vmatprep.subr.mxu0 0.0
      %510 = vmatpush1.msra.mxu0 0.0
      %511 = vmatprep.subr.mxu0 0.0
      %512 = vmatpush1.msra.mxu0 0.0
      %513 = vmatprep.subr.mxu0 0.0
      %514 = vmatpush1.msra.mxu0 0.0
      %515 = vmatprep.subr.mxu0 0.0
      %516 = vmatpush1.msra.mxu0 0.0
      %517 = vmatprep.subr.mxu0 0.0
      %518 = vmatpush1.msra.mxu0 0.0
      %519 = vmatprep.subr.mxu0 0.0
      %520 = vmatpush1.msra.mxu0 0.0
      %521 = vmatprep.subr.mxu0 0.0
      %522 = vmatpush1.msra.mxu0 0.0
      %523 = vmatprep.subr.mxu0 0.0
      %524 = vmatpush1.msra.mxu0 0.0
      %525 = vmatprep.subr.mxu0 0.0
      %526 = vmatpush1.msra.mxu0 0.0
      %527 = vmatprep.subr.mxu0 0.0
      %528 = vmatpush1.msra.mxu0 0.0
      %529 = vmatprep.subr.mxu0 0.0
      %530 = vmatpush1.msra.mxu0 0.0
      %531 = vmatprep.subr.mxu0 0.0
      %532 = vmatpush1.msra.mxu0 0.0
      %533 = vmatprep.subr.mxu0 0.0
      %534 = vmatpush1.msra.mxu0 0.0
      %535 = vmatprep.subr.mxu0 0.0
      %536 = vmatpush1.msra.mxu0 0.0
      %537 = vmatprep.subr.mxu0 0.0
      %538 = vmatpush1.msra.mxu0 0.0
      %539 = vmatprep.subr.mxu0 0.0
      %540 = vmatpush1.msra.mxu0 0.0
      %541 = vmatprep.subr.mxu0 0.0
      %542 = vmatpush1.msra.mxu0 0.0
      %543 = vmatprep.subr.mxu0 0.0
      %544 = vmatpush1.msra.mxu0 0.0
      %545 = vmatprep.mubr.f32.mxu0 0.0
      %546 = vmatmul.mubr.f32.gmra.mrb[0].mxu0 %v479
      %v547 = vpop.f32.mrb[0].mxu0
      %v548 = vadd.f32 0.0, %v547
      %v549 = vpop.f32.mrb[0].mxu0
      %550 = vdwg.mxu0
      %v551 = vadd.f32 %v469, %v548
      %s552 = scalar_lea.vmem %s3, 64
      %v553 = vld [vmem:[%s552] sm:$0xff]
      %v554 = vld [vmem:[%s552 + $0x8] sm:$0xff]
      %v555 = vld [vmem:[%s552 + $0x10] sm:$0xff]
      %v556 = vld [vmem:[%s552 + $0x18] sm:$0xff]
      %v557 = vsel %vm366, %v378, 0
      %559 = vmatprep.subr.mxu0 0.0
      %560 = vmatpush1.msra.mxu0 %v553
      %561 = vmatprep.subr.mxu0 0.0
      %562 = vmatpush1.msra.mxu0 %v554
      %563 = vmatprep.subr.mxu0 0.0
      %564 = vmatpush1.msra.mxu0 %v555
      %565 = vmatprep.subr.mxu0 0.0
      %566 = vmatpush1.msra.mxu0 %v556
      %567 = vmatprep.subr.mxu0 0.0
      %568 = vmatpush1.msra.mxu0 0.0
      %569 = vmatprep.subr.mxu0 0.0
      %570 = vmatpush1.msra.mxu0 0.0
      %571 = vmatprep.subr.mxu0 0.0
      %572 = vmatpush1.msra.mxu0 0.0
      %573 = vmatprep.subr.mxu0 0.0
      %574 = vmatpush1.msra.mxu0 0.0
      %575 = vmatprep.subr.mxu0 0.0
      %576 = vmatpush1.msra.mxu0 0.0
      %577 = vmatprep.subr.mxu0 0.0
      %578 = vmatpush1.msra.mxu0 0.0
      %579 = vmatprep.subr.mxu0 0.0
      %580 = vmatpush1.msra.mxu0 0.0
      %581 = vmatprep.subr.mxu0 0.0
      %582 = vmatpush1.msra.mxu0 0.0
      %583 = vmatprep.subr.mxu0 0.0
      %584 = vmatpush1.msra.mxu0 0.0
      %585 = vmatprep.subr.mxu0 0.0
      %586 = vmatpush1.msra.mxu0 0.0
      %587 = vmatprep.subr.mxu0 0.0
      %588 = vmatpush1.msra.mxu0 0.0
      %589 = vmatprep.subr.mxu0 0.0
      %590 = vmatpush1.msra.mxu0 0.0
      %591 = vmatprep.subr.mxu0 0.0
      %592 = vmatpush1.msra.mxu0 0.0
      %593 = vmatprep.subr.mxu0 0.0
      %594 = vmatpush1.msra.mxu0 0.0
      %595 = vmatprep.subr.mxu0 0.0
      %596 = vmatpush1.msra.mxu0 0.0
      %597 = vmatprep.subr.mxu0 0.0
      %598 = vmatpush1.msra.mxu0 0.0
      %599 = vmatprep.subr.mxu0 0.0
      %600 = vmatpush1.msra.mxu0 0.0
      %601 = vmatprep.subr.mxu0 0.0
      %602 = vmatpush1.msra.mxu0 0.0
      %603 = vmatprep.subr.mxu0 0.0
      %604 = vmatpush1.msra.mxu0 0.0
      %605 = vmatprep.subr.mxu0 0.0
      %606 = vmatpush1.msra.mxu0 0.0
      %607 = vmatprep.subr.mxu0 0.0
      %608 = vmatpush1.msra.mxu0 0.0
      %609 = vmatprep.subr.mxu0 0.0
      %610 = vmatpush1.msra.mxu0 0.0
      %611 = vmatprep.subr.mxu0 0.0
      %612 = vmatpush1.msra.mxu0 0.0
      %613 = vmatprep.subr.mxu0 0.0
      %614 = vmatpush1.msra.mxu0 0.0
      %615 = vmatprep.subr.mxu0 0.0
      %616 = vmatpush1.msra.mxu0 0.0
      %617 = vmatprep.subr.mxu0 0.0
      %618 = vmatpush1.msra.mxu0 0.0
      %619 = vmatprep.subr.mxu0 0.0
      %620 = vmatpush1.msra.mxu0 0.0
      %621 = vmatprep.subr.mxu0 0.0
      %622 = vmatpush1.msra.mxu0 0.0
      %623 = vmatprep.mubr.f32.mxu0 0.0
      %624 = vmatmul.mubr.f32.gmra.mrb[0].mxu0 %v557
      %v625 = vpop.f32.mrb[0].mxu0
      %v626 = vadd.f32 0.0, %v625
      %v627 = vpop.f32.mrb[0].mxu0
      %628 = vdwg.mxu0
      %v629 = vadd.f32 %v551, %v626
      %s630 = scalar_lea.vmem %s3, 96
      %v631 = vld [vmem:[%s630] sm:$0xff]
      %v632 = vld [vmem:[%s630 + $0x8] sm:$0xff]
      %v633 = vld [vmem:[%s630 + $0x10] sm:$0xff]
      %v634 = vld [vmem:[%s630 + $0x18] sm:$0xff]
      %vm636 = vcmask 1046528
      %v637 = vrot.slane %v378, 1
      %v638 = vrot.slane %v379, 1
      %v639 = vsel %vm636, %v637, %v638
      %v640 = vsel %vm366, %v639, 0
      %642 = vmatprep.subr.mxu0 0.0
      %643 = vmatpush1.msra.mxu0 %v631
      %644 = vmatprep.subr.mxu0 0.0
      %645 = vmatpush1.msra.mxu0 %v632
      %646 = vmatprep.subr.mxu0 0.0
      %647 = vmatpush1.msra.mxu0 %v633
      %648 = vmatprep.subr.mxu0 0.0
      %649 = vmatpush1.msra.mxu0 %v634
      %650 = vmatprep.subr.mxu0 0.0
      %651 = vmatpush1.msra.mxu0 0.0
      %652 = vmatprep.subr.mxu0 0.0
      %653 = vmatpush1.msra.mxu0 0.0
      %654 = vmatprep.subr.mxu0 0.0
      %655 = vmatpush1.msra.mxu0 0.0
      %656 = vmatprep.subr.mxu0 0.0
      %657 = vmatpush1.msra.mxu0 0.0
      %658 = vmatprep.subr.mxu0 0.0
      %659 = vmatpush1.msra.mxu0 0.0
      %660 = vmatprep.subr.mxu0 0.0
      %661 = vmatpush1.msra.mxu0 0.0
      %662 = vmatprep.subr.mxu0 0.0
      %663 = vmatpush1.msra.mxu0 0.0
      %664 = vmatprep.subr.mxu0 0.0
      %665 = vmatpush1.msra.mxu0 0.0
      %666 = vmatprep.subr.mxu0 0.0
      %667 = vmatpush1.msra.mxu0 0.0
      %668 = vmatprep.subr.mxu0 0.0
      %669 = vmatpush1.msra.mxu0 0.0
      %670 = vmatprep.subr.mxu0 0.0
      %671 = vmatpush1.msra.mxu0 0.0
      %672 = vmatprep.subr.mxu0 0.0
      %673 = vmatpush1.msra.mxu0 0.0
      %674 = vmatprep.subr.mxu0 0.0
      %675 = vmatpush1.msra.mxu0 0.0
      %676 = vmatprep.subr.mxu0 0.0
      %677 = vmatpush1.msra.mxu0 0.0
      %678 = vmatprep.subr.mxu0 0.0
      %679 = vmatpush1.msra.mxu0 0.0
      %680 = vmatprep.subr.mxu0 0.0
      %681 = vmatpush1.msra.mxu0 0.0
      %682 = vmatprep.subr.mxu0 0.0
      %683 = vmatpush1.msra.mxu0 0.0
      %684 = vmatprep.subr.mxu0 0.0
      %685 = vmatpush1.msra.mxu0 0.0
      %686 = vmatprep.subr.mxu0 0.0
      %687 = vmatpush1.msra.mxu0 0.0
      %688 = vmatprep.subr.mxu0 0.0
      %689 = vmatpush1.msra.mxu0 0.0
      %690 = vmatprep.subr.mxu0 0.0
      %691 = vmatpush1.msra.mxu0 0.0
      %692 = vmatprep.subr.mxu0 0.0
      %693 = vmatpush1.msra.mxu0 0.0
      %694 = vmatprep.subr.mxu0 0.0
      %695 = vmatpush1.msra.mxu0 0.0
      %696 = vmatprep.subr.mxu0 0.0
      %697 = vmatpush1.msra.mxu0 0.0
      %698 = vmatprep.subr.mxu0 0.0
      %699 = vmatpush1.msra.mxu0 0.0
      %700 = vmatprep.subr.mxu0 0.0
      %701 = vmatpush1.msra.mxu0 0.0
      %702 = vmatprep.subr.mxu0 0.0
      %703 = vmatpush1.msra.mxu0 0.0
      %704 = vmatprep.subr.mxu0 0.0
      %705 = vmatpush1.msra.mxu0 0.0
      %706 = vmatprep.mubr.f32.mxu0 0.0
      %707 = vmatmul.mubr.f32.gmra.mrb[0].mxu0 %v640
      %v708 = vpop.f32.mrb[0].mxu0
      %v709 = vadd.f32 0.0, %v708
      %v710 = vpop.f32.mrb[0].mxu0
      %711 = vdwg.mxu0
      %v712 = vadd.f32 %v629, %v709
      %s713 = scalar_lea.vmem %s3, 128
      %v714 = vld [vmem:[%s713] sm:$0xff]
      %v715 = vld [vmem:[%s713 + $0x8] sm:$0xff]
      %v716 = vld [vmem:[%s713 + $0x10] sm:$0xff]
      %v717 = vld [vmem:[%s713 + $0x18] sm:$0xff]
      %vm718 = vcmask 1045504
      %v719 = vrot.slane %v378, 2
      %v720 = vrot.slane %v379, 2
      %v721 = vsel %vm718, %v719, %v720
      %v722 = vsel %vm366, %v721, 0
      %724 = vmatprep.subr.mxu0 0.0
      %725 = vmatpush1.msra.mxu0 %v714
      %726 = vmatprep.subr.mxu0 0.0
      %727 = vmatpush1.msra.mxu0 %v715
      %728 = vmatprep.subr.mxu0 0.0
      %729 = vmatpush1.msra.mxu0 %v716
      %730 = vmatprep.subr.mxu0 0.0
      %731 = vmatpush1.msra.mxu0 %v717
      %732 = vmatprep.subr.mxu0 0.0
      %733 = vmatpush1.msra.mxu0 0.0
      %734 = vmatprep.subr.mxu0 0.0
      %735 = vmatpush1.msra.mxu0 0.0
      %736 = vmatprep.subr.mxu0 0.0
      %737 = vmatpush1.msra.mxu0 0.0
      %738 = vmatprep.subr.mxu0 0.0
      %739 = vmatpush1.msra.mxu0 0.0
      %740 = vmatprep.subr.mxu0 0.0
      %741 = vmatpush1.msra.mxu0 0.0
      %742 = vmatprep.subr.mxu0 0.0
      %743 = vmatpush1.msra.mxu0 0.0
      %744 = vmatprep.subr.mxu0 0.0
      %745 = vmatpush1.msra.mxu0 0.0
      %746 = vmatprep.subr.mxu0 0.0
      %747 = vmatpush1.msra.mxu0 0.0
      %748 = vmatprep.subr.mxu0 0.0
      %749 = vmatpush1.msra.mxu0 0.0
      %750 = vmatprep.subr.mxu0 0.0
      %751 = vmatpush1.msra.mxu0 0.0
      %752 = vmatprep.subr.mxu0 0.0
      %753 = vmatpush1.msra.mxu0 0.0
      %754 = vmatprep.subr.mxu0 0.0
      %755 = vmatpush1.msra.mxu0 0.0
      %756 = vmatprep.subr.mxu0 0.0
      %757 = vmatpush1.msra.mxu0 0.0
      %758 = vmatprep.subr.mxu0 0.0
      %759 = vmatpush1.msra.mxu0 0.0
      %760 = vmatprep.subr.mxu0 0.0
      %761 = vmatpush1.msra.mxu0 0.0
      %762 = vmatprep.subr.mxu0 0.0
      %763 = vmatpush1.msra.mxu0 0.0
      %764 = vmatprep.subr.mxu0 0.0
      %765 = vmatpush1.msra.mxu0 0.0
      %766 = vmatprep.subr.mxu0 0.0
      %767 = vmatpush1.msra.mxu0 0.0
      %768 = vmatprep.subr.mxu0 0.0
      %769 = vmatpush1.msra.mxu0 0.0
      %770 = vmatprep.subr.mxu0 0.0
      %771 = vmatpush1.msra.mxu0 0.0
      %772 = vmatprep.subr.mxu0 0.0
      %773 = vmatpush1.msra.mxu0 0.0
      %774 = vmatprep.subr.mxu0 0.0
      %775 = vmatpush1.msra.mxu0 0.0
      %776 = vmatprep.subr.mxu0 0.0
      %777 = vmatpush1.msra.mxu0 0.0
      %778 = vmatprep.subr.mxu0 0.0
      %779 = vmatpush1.msra.mxu0 0.0
      %780 = vmatprep.subr.mxu0 0.0
      %781 = vmatpush1.msra.mxu0 0.0
      %782 = vmatprep.subr.mxu0 0.0
      %783 = vmatpush1.msra.mxu0 0.0
      %784 = vmatprep.subr.mxu0 0.0
      %785 = vmatpush1.msra.mxu0 0.0
      %786 = vmatprep.subr.mxu0 0.0
      %787 = vmatpush1.msra.mxu0 0.0
      %788 = vmatprep.mubr.f32.mxu0 0.0
      %789 = vmatmul.mubr.f32.gmra.mrb[0].mxu0 %v722
      %v790 = vpop.f32.mrb[0].mxu0
      %v791 = vadd.f32 0.0, %v790
      %v792 = vpop.f32.mrb[0].mxu0
      %793 = vdwg.mxu0
      %v794 = vadd.f32 %v712, %v791
      %v795 = vmax.f32 %v794, 0.0
      %797 = vrot.lane.b32.xlu0 %v795, 126
      %v798 = vpop.permute.xlu0 %797
      %v800 = vadd.f32 %v795, %v798
      %801 = vrot.lane.b32.xlu0 %v795, 124
      %v802 = vpop.permute.xlu0 %801
      %v804 = vadd.f32 %v800, %v802
      %vm805 = vcmask 15360
      %806 = vst.msk [vmem:[%s359] sm:$0xff] %vm805, %v804
      %p807 = scmp.lt.s32.totalorder %s20, 1
      %s808 = scalar_select %p807, %s20, 1
      %p809 = scmp.lt.s32.totalorder %s21, 3
      %s810 = scalar_select %p809, %s21, 3
      %s811 = smul.addr %s808, 4
      %s812 = sadd.s32 %s810, %s811
      %s813 = smul.addr %s812, 8
      %s814 = scalar_lea.vmem %s5, %s813
      // Predicated region
      $region41: #{tpu_custom_call.1} parent=39 // pred_check
        %p815 = pneg %p186
      $region42: #{tpu_custom_call.1} parent=39 // pred_check_branch
        %817 = sbr.rel (%p815) target = $region44
      $region43: #{tpu_custom_call.1} parent=39 // pred_region
        _
      $region44: #{tpu_custom_call.1} parent=39 // pred_fallthru
        _
    $region40: #{tpu_custom_call.1} parent=5 // pred_fallthru
      _
    %p818 = scmp.le.s32.totalorder 2, %s11
    // Predicated region
    $region45: #{tpu_custom_call.1} parent=5 // pred_check
      %p819 = pneg %p818
    $region46: #{tpu_custom_call.1} parent=5 // pred_check_branch
      %821 = sbr.rel (%p819) target = $region48
    $region47: #{tpu_custom_call.1} parent=5 // pred_region
      %s822 = ssub.s32 %s11, 2
      // Predicated region
      $region49: #{tpu_custom_call.1} parent=47 // pred_check
        %p823 = pneg %p192
      $region50: #{tpu_custom_call.1} parent=47 // pred_check_branch
        %825 = sbr.rel (%p823) target = $region52
      $region51: #{tpu_custom_call.1} parent=47 // pred_region
        %p826 = scmp.lt.s32.totalorder %s22, 1
        %s827 = scalar_select %p826, %s22, 1
        %p828 = scmp.lt.s32.totalorder %s23, 3
        %s829 = scalar_select %p828, %s23, 3
        %s830 = smul.addr %s827, 4
        %s831 = sadd.s32 %s829, %s830
        %s832 = smul.addr %s831, 8
        %s833 = scalar_lea.vmem %s5, %s832
      $region52: #{tpu_custom_call.1} parent=47 // pred_fallthru
        _
    $region48: #{tpu_custom_call.1} parent=5 // pred_fallthru
      _
  $region6: #{tpu_custom_call.1} parent=0 // loop_footer
    %s15 = sadd.s32 1, %s11
  $region7: #{tpu_custom_call.1} parent=0 // loop_footer_branch
    %10 = sbr.rel target = $region3
  $region8: #{tpu_custom_call.1} parent=0 // loop_exit
    _

</llo_original>
